<compile_context>
chip_gen: v6e
topology: v6e:2x2x1
jax: 0.10.0
libtpu: 0.0.40
codegen_flags: <defaults>
</compile_context>

<pallas_src>
import jax
import jax.numpy as jnp
from jax import lax
from jax.experimental import pallas as pl
from jax.experimental.pallas import tpu as pltpu


_VMEM_LIMIT = 48 * 1024 * 1024   # explicit scoped-VMEM budget (safe on v5e/v6e/v7x)


def _round_up(x, m):
    return (x + m - 1) // m * m


def _pick_tile(n, candidates):
    for c in candidates:
        if n % c == 0:
            return c
    return n


def _pad_to(a, axis, new_size):
    if a.shape[axis] == new_size:
        return a
    pad = [(0, 0)] * a.ndim
    pad[axis] = (0, new_size - a.shape[axis])
    return jnp.pad(a, pad)


def _sigmoid(x):
    # sigmoid(x) == 0.5 * tanh(0.5 * x) + 0.5  (exact; one EUP op per map
    # instead of exp + reciprocal on the serial recurrence path).
    return 0.5 * jnp.tanh(0.5 * x) + 0.5


# ---------------------------------------------------------------------------
# Parallel tiled  out = x @ w + b  (stage 1: input projection, stage 3: vocab
# projection).  f32 accumulation; operands in whatever dtype the caller passes
# (bf16 on the default production path).
# ---------------------------------------------------------------------------
def _matmul_bias_kernel(x_ref, w_ref, b_ref, o_ref):
    acc = jnp.dot(x_ref[...], w_ref[...], preferred_element_type=jnp.float32)
    o_ref[...] = (acc + b_ref[...]).astype(o_ref.dtype)


def _matmul_bias(x, w, b, out_dtype):
    """x: (M, K), w: (K, N), b: (1, N) -> (M, N).  M % 8 == 0, N % 128 == 0.

    K stays un-tiled (fine for E/H up to a few thousand).  Large row/col tiles
    (up to 1024) minimise how often w is re-streamed from HBM.
    """
    M, K = x.shape
    N = w.shape[1]
    tm = _pick_tile(M, (1024, 512, 256, 128, 64, 32, 16, 8))
    tn = _pick_tile(N, (1024, 512, 256, 128))
    grid = (M // tm, N // tn)
    return pl.pallas_call(
        _matmul_bias_kernel,
        out_shape=jax.ShapeDtypeStruct((M, N), out_dtype),
        grid_spec=pltpu.PrefetchScalarGridSpec(
            num_scalar_prefetch=0,
            grid=grid,
            in_specs=[
                pl.BlockSpec((tm, K), lambda i, j: (i, 0)),
                pl.BlockSpec((K, tn), lambda i, j: (0, j)),
                pl.BlockSpec((1, tn), lambda i, j: (0, j)),
            ],
            out_specs=pl.BlockSpec((tm, tn), lambda i, j: (i, j)),
        ),
        compiler_params=pltpu.CompilerParams(
            dimension_semantics=("parallel", "parallel"),
            vmem_limit_bytes=_VMEM_LIMIT),
    )(x, w, b)


# ---------------------------------------------------------------------------
# Sequential LSTM recurrence.  grid = (batch_tiles "parallel", chunks
# "arbitrary"); h/c live in f32 VMEM scratch across chunks.  Output is written
# TIME-major so every per-step store is a dense (tb, Hp) slab.
# ---------------------------------------------------------------------------
def _lstm_recurrence_kernel(gx_ref, whh_ref, h_out_ref, h_scr, c_scr):
    @pl.when(pl.program_id(1) == 0)          # first chunk of this batch tile
    def _init():
        h_scr[...] = jnp.zeros_like(h_scr)
        c_scr[...] = jnp.zeros_like(c_scr)

    Hp = h_scr.shape[-1]
    TS = gx_ref.shape[0]
    whh = whh_ref[...]                        # hoisted grid-invariant weight

    def step(ts, carry):
        h, c = carry                          # f32 state
        gates = gx_ref[ts].astype(jnp.float32) + jnp.dot(
            h.astype(whh.dtype), whh, preferred_element_type=jnp.float32)
        # Hp is a multiple of 128 -> lane-aligned gate slices (order i, f, g, o).
        i_g = _sigmoid(gates[:, 0 * Hp:1 * Hp])
        f_g = _sigmoid(gates[:, 1 * Hp:2 * Hp])
        g_g = jnp.tanh(gates[:, 2 * Hp:3 * Hp])
        o_g = _sigmoid(gates[:, 3 * Hp:4 * Hp])
        c_new = f_g * c + i_g * g_g
        h_new = o_g * jnp.tanh(c_new)
        # Dense time-major store: (tb, Hp) slab, tb % 8 == 0, Hp % 128 == 0.
        h_out_ref[ts] = h_new.astype(h_out_ref.dtype)
        return h_new, c_new

    h_f, c_f = lax.fori_loop(0, TS, step, (h_scr[...], c_scr[...]), unroll=True)
    h_scr[...] = h_f
    c_scr[...] = c_f


def _run_recurrence(gates_x, whh, *, TS, tb, compute_dtype):
    Tp, Bp, _ = gates_x.shape
    Hp = whh.shape[0]
    n_chunks = Tp // TS
    batch_tiles = Bp // tb

    def call(whh_spec):
        return pl.pallas_call(
            _lstm_recurrence_kernel,
            out_shape=jax.ShapeDtypeStruct((Tp, Bp, Hp), compute_dtype),
            grid_spec=pltpu.PrefetchScalarGridSpec(
                num_scalar_prefetch=0,
                grid=(batch_tiles, n_chunks),
                in_specs=[
                    pl.BlockSpec((TS, tb, 4 * Hp), lambda bt, c: (c, bt, 0)),
                    whh_spec,
                ],
                out_specs=pl.BlockSpec((TS, tb, Hp), lambda bt, c: (c, bt, 0)),
                scratch_shapes=[
                    pltpu.VMEM((tb, Hp), jnp.float32),     # h state
                    pltpu.VMEM((tb, Hp), jnp.float32),     # c state
                ],
            ),
            compiler_params=pltpu.CompilerParams(
                dimension_semantics=("parallel", "arbitrary"),
                vmem_limit_bytes=_VMEM_LIMIT),
        )(gates_x, whh)

    # W_hh is grid-invariant: request a single VMEM buffer (halves its resident
    # footprint).  Fall back to the default pipelining if unsupported.
    try:
        return call(pl.BlockSpec((Hp, 4 * Hp), lambda bt, c: (0, 0),
                                 pipeline_mode=pl.Buffered(1)))
    except Exception:
        return call(pl.BlockSpec((Hp, 4 * Hp), lambda bt, c: (0, 0)))


# ---------------------------------------------------------------------------
# Wrapper: glue + padding + the three stages.
# ---------------------------------------------------------------------------
def decoder_forward_pallas(features, captions, params, *,
                           compute_dtype=jnp.bfloat16, batch_tiles=1):
    """features: (B, E) f32, captions: (B, Tc) int32 -> logits (B, Tc, V) f32.

    compute_dtype (default bf16) controls only the MXU operand dtype and the
    gates_x / h staging buffers; accumulation and all gate / c / h math stay
    in f32.  batch_tiles splits the recurrence batch across a "parallel" grid
    axis: set 2 on v7x when B >= 16 so both TensorCores run the recurrence
    (leave at 1 on single-core v5e/v6e).
    """
    w_emb = params["w_emb"]            # (V, E)
    w_ih = params["w_ih"]              # (E, 4H)
    w_hh = params["w_hh"]              # (H, 4H)
    b = params["b"]                    # (1, 4H)  (= b_ih + b_hh)
    w_out = params["w_out"]            # (H, V)
    b_out = params["b_out"]            # (1, V)

    B, E = features.shape
    H = w_hh.shape[0]
    V = w_out.shape[1]
    T = captions.shape[1]              # = Tc

    # ---- lane/sublane-aligned padding (padded units stay exactly zero) ------
    Hp = _round_up(H, 128)
    Bp = _round_up(B, 8 * batch_tiles)
    tb = Bp // batch_tiles
    Vp128 = _round_up(V, 128)
    if Vp128 >= 4096:
        tn_v = 1024
    elif Vp128 >= 512:
        tn_v = 512
    else:
        tn_v = Vp128
    Vp = _round_up(V, tn_v)            # pad vocab up to the chosen tile width

    w_ih_p = _pad_to(w_ih.reshape(E, 4, H), 2, Hp).reshape(E, 4 * Hp)
    b_p = _pad_to(b.reshape(1, 4, H), 2, Hp).reshape(1, 4 * Hp)
    w_hh_p = _pad_to(_pad_to(w_hh.reshape(H, 4, H), 2, Hp), 0, Hp).reshape(Hp, 4 * Hp)
    w_out_p = _pad_to(_pad_to(w_out, 0, Hp), 1, Vp)
    b_out_p = _pad_to(b_out, 1, Vp)

    # ---- build the LSTM input time-major (only the tiny int32 caption tensor
    #      and the small h tensor are ever transposed, never the logits) ------
    features_p = _pad_to(features, 0, Bp)
    captions_p = _pad_to(captions, 0, Bp)
    emb_tm = w_emb[captions_p[:, :-1].T]                          # (T-1, Bp, E)
    x_tm = jnp.concatenate([features_p[None, :, :], emb_tm], 0)   # (T, Bp, E)

    # time chunking: Tp == round_up(T, 8) always -> at most 7 padded serial steps
    if T <= 32:
        TS = _round_up(T, 8)
    else:
        TS = 8 if _round_up(T, 8) < _round_up(T, 16) else 16
    Tp = _round_up(T, TS)
    x_tm = _pad_to(x_tm, 0, Tp)                                   # (Tp, Bp, E)

    # ---- 1) hoisted input projection (parallel MXU matmul), staged in
    #         compute_dtype (bf16 default) to halve its HBM/VMEM traffic ------
    gates_x = _matmul_bias(
        x_tm.reshape(Tp * Bp, E).astype(compute_dtype),
        w_ih_p.astype(compute_dtype),
        b_p.astype(jnp.float32),
        out_dtype=compute_dtype,
    ).reshape(Tp, Bp, 4 * Hp)

    # ---- 2) sequential recurrence (dense time-major per-step h stores) ------
    h_tm = _run_recurrence(gates_x, w_hh_p.astype(compute_dtype),
                           TS=TS, tb=tb, compute_dtype=compute_dtype)

    # ---- 3) batch-major re-layout of the *small* h tensor (T*B*Hp elements,
    #         far cheaper than re-laying-out logits), then the deferred fully
    #         parallel vocab projection writes logits batch-major directly ----
    h_bm = jnp.transpose(h_tm, (1, 0, 2)).reshape(Bp * Tp, Hp)
    logits = _matmul_bias(
        h_bm,
        w_out_p.astype(compute_dtype),
        b_out_p.astype(jnp.float32),
        out_dtype=jnp.float32,
    ).reshape(Bp, Tp, Vp)

    # Drop batch/time/vocab padding.  Output is already batch-first.
    return logits[:B, :T, :V]


# ---------------------------------------------------------------------------
# Pure-JAX reference matching torch.nn.LSTM semantics (gate order i, f, g, o).
# ---------------------------------------------------------------------------
def decoder_forward_ref(features, captions, params):
    w_emb, w_ih, w_hh = params["w_emb"], params["w_ih"], params["w_hh"]
    b, w_out, b_out = params["b"], params["w_out"], params["b_out"]
    H = w_hh.shape[0]

    emb = w_emb[captions]
    x = jnp.concatenate([features[:, None, :], emb], axis=1)[:, :-1, :]
    B = x.shape[0]

    def step(carry, x_t):
        h, c = carry
        gates = x_t @ w_ih + h @ w_hh + b
        i = jax.nn.sigmoid(gates[:, 0 * H:1 * H])
        f = jax.nn.sigmoid(gates[:, 1 * H:2 * H])
        g = jnp.tanh(gates[:, 2 * H:3 * H])
        o = jax.nn.sigmoid(gates[:, 3 * H:4 * H])
        c = f * c + i * g
        h = o * jnp.tanh(c)
        return (h, c), h @ w_out + b_out

    h0 = jnp.zeros((B, H), jnp.float32)
    c0 = jnp.zeros((B, H), jnp.float32)
    _, out = lax.scan(step, (h0, c0), jnp.transpose(x, (1, 0, 2)))
    return jnp.transpose(out, (1, 0, 2))


def init_params(key, embed_size, hidden_size, vocab_size):
    ks = jax.random.split(key, 6)
    s = 0.1
    return {
        "w_emb": s * jax.random.normal(ks[0], (vocab_size, embed_size), jnp.float32),
        "w_ih":  s * jax.random.normal(ks[1], (embed_size, 4 * hidden_size), jnp.float32),
        "w_hh":  s * jax.random.normal(ks[2], (hidden_size, 4 * hidden_size), jnp.float32),
        "b":     s * jax.random.normal(ks[3], (1, 4 * hidden_size), jnp.float32),
        "w_out": s * jax.random.normal(ks[4], (hidden_size, vocab_size), jnp.float32),
        "b_out": s * jax.random.normal(ks[5], (1, vocab_size), jnp.float32),
    }


if __name__ == "__main__":
    B, Tc = 2, 8                  # batch, caption length
    E, H, V = 32, 32, 64          # embed_size, hidden_size, vocab_size

    key = jax.random.PRNGKey(0)
    k_p, k_f, k_c = jax.random.split(key, 3)
    params = init_params(k_p, E, H, V)
    features = jax.random.normal(k_f, (B, E), jnp.float32)
    captions = jax.random.randint(k_c, (B, Tc), 0, V, jnp.int32)

    ref = decoder_forward_ref(features, captions, params)

    # f32 MXU-operand path: tight check against the lax.scan reference.
    out_f32 = jax.block_until_ready(
        decoder_forward_pallas(features, captions, params,
                               compute_dtype=jnp.float32))
    assert out_f32.shape == (B, Tc, V), out_f32.shape
    assert jnp.allclose(out_f32, ref, atol=1e-4, rtol=1e-4), "f32 mismatch vs reference"

    # Default production path: bf16 MXU operands + bf16 gates_x / h staging
    # (f32 accumulation and f32 gate/c/h math throughout).
    out = jax.block_until_ready(decoder_forward_pallas(features, captions, params))
    assert out.shape == (B, Tc, V), out.shape
    assert jnp.allclose(out, ref, atol=5e-2, rtol=5e-2), "bf16 mismatch vs reference"

    # TODO(synk): `sample()` (greedy decode with data-dependent early break) is
    # host-side control flow and is not implemented as a kernel.
    print("KERNEL_OK")
</pallas_src>

<mosaic_0001>
module attributes {stable_mosaic.version = 11 : i64} {
  func.func @_matmul_bias_kernel(%arg0: i32, %arg1: i32, %arg2: memref<64x32xf32, #tpu.memory_space<vmem>>, %arg3: memref<32x512xf32, #tpu.memory_space<vmem>>, %arg4: memref<1x512xf32, #tpu.memory_space<vmem>>, %arg5: memref<64x512xf32, #tpu.memory_space<vmem>>) attributes {dimension_semantics = [#tpu.dimension_semantics<parallel>, #tpu.dimension_semantics<parallel>], iteration_bounds = array<i64: 1, 1>, scalar_prefetch = 0 : i64, scratch_operands = 0 : i64, tpu.core_type = #tpu.core_type<tc>, window_params = [{transform_indices = @transform_0, window_bounds = array<i64: 64, 32>}, {transform_indices = @transform_1, window_bounds = array<i64: 32, 512>}, {transform_indices = @transform_2, window_bounds = array<i64: 1, 512>}, {transform_indices = @transform_3, window_bounds = array<i64: 64, 512>}]} {
    %c0 = arith.constant 0 : index
    %c0_0 = arith.constant 0 : index
    %0 = vector.load %arg2[%c0, %c0_0] : memref<64x32xf32, #tpu.memory_space<vmem>>, vector<64x32xf32>
    %c0_1 = arith.constant 0 : index
    %c0_2 = arith.constant 0 : index
    %1 = vector.load %arg3[%c0_1, %c0_2] : memref<32x512xf32, #tpu.memory_space<vmem>>, vector<32x512xf32>
    %cst = arith.constant dense<0.000000e+00> : vector<64x512xf32>
    %2 = tpu.matmul %0, %1, %cst {dimension_numbers = #tpu.dot_dimension_numbers<[1], [0], [0], [1], [0, 0, 1, 1], [], []>} : vector<64x32xf32>, vector<32x512xf32>, vector<64x512xf32> -> vector<64x512xf32>
    %c0_3 = arith.constant 0 : index
    %c0_4 = arith.constant 0 : index
    %3 = vector.load %arg4[%c0_3, %c0_4] : memref<1x512xf32, #tpu.memory_space<vmem>>, vector<1x512xf32>
    %4 = vector.broadcast %3 : vector<1x512xf32> to vector<64x512xf32>
    %5 = arith.addf %2, %4 : vector<64x512xf32>
    %c0_5 = arith.constant 0 : index
    %c0_6 = arith.constant 0 : index
    %6 = vector.load %arg5[%c0_5, %c0_6] : memref<64x512xf32, #tpu.memory_space<vmem>>, vector<64x512xf32>
    tpu.vector_store %arg5[%c0_5, %c0_6], %5 {strides = array<i32>} : memref<64x512xf32, #tpu.memory_space<vmem>>, vector<64x512xf32>,
    return
  }
  func.func @transform_0(%arg0: i32, %arg1: i32) -> (i32, i32) {
    %c0_i32 = arith.constant 0 : i32
    %c0_i32_0 = arith.constant 0 : i32
    return %arg0, %c0_i32 : i32, i32
  }
  func.func @transform_1(%arg0: i32, %arg1: i32) -> (i32, i32) {
    %c0_i32 = arith.constant 0 : i32
    %c0_i32_0 = arith.constant 0 : i32
    return %c0_i32, %arg1 : i32, i32
  }
  func.func @transform_2(%arg0: i32, %arg1: i32) -> (i32, i32) {
    %c0_i32 = arith.constant 0 : i32
    %c0_i32_0 = arith.constant 0 : i32
    return %c0_i32, %arg1 : i32, i32
  }
  func.func @transform_3(%arg0: i32, %arg1: i32) -> (i32, i32) {
    %c0_i32 = arith.constant 0 : i32
    return %arg0, %arg1 : i32, i32
  }
}

</mosaic_0001>

<llo_original>
// kernel: tpu_custom_call.1
$region0: #{tpu_custom_call.1}
  #allocation0 [shape = 'u32[]', space=smem, size = 0x4, offset = 0x4, fixed_abs, tag = 'smem constant byte address 0x4 - core index']
  #allocation1 [shape = 'u32[144,128]{1,0:T(1,128)}', space=vmem, size = 0x12000, scoped, tag = 'internal scratch']
  %s0 = inlined_call_operand.vmem [shape: f32[64,32], index: 0, kind: input, shape index: {}]
  %s1 = inlined_call_operand.hbm [shape: f32[32,512], index: 1, kind: input, shape index: {}]
  %s2 = inlined_call_operand.vmem [shape: f32[1,512], index: 2, kind: input, shape index: {}]
  %s3 = inlined_call_operand.hbm [shape: f32[64,512], index: 3, kind: output, shape index: {}]
  %s4 = sld [smem:[#allocation0]]
  $region26: #{tpu_custom_call.1} parent=0
    _
  %s6 = ssub.s32 1, %s4
  %s7 = scalar_select 0, %s6, %s4
  $region1: #{tpu_custom_call.1} parent=0
    #allocation2 [shape = 'u8[65536]{0}', space=vmem, size = 0x10000, scoped, tag = 'input window, operand 1, single buffered']
    #allocation3 [shape = 's32[1]{0}', space=sflag, size = 0x4, scoped, tag = 'scoped memory for tpu_custom_call.1']
    #allocation4 [shape = 's32[1]{0}', space=sflag, size = 0x4, scoped, tag = 'scoped memory for tpu_custom_call.1']
    #allocation5 [shape = 'u8[131072]{0}', space=vmem, size = 0x20000, scoped, tag = 'output window, operand 0, single buffered']
    %8 = vsyncpa [#allocation3], 0
    %9 = vsyncpa [#allocation4], 0
    // Predicated region
    $region2: #{tpu_custom_call.1} parent=1 // pred_check
      _
    $region3: #{tpu_custom_call.1} parent=1 // pred_check_branch
      %11 = sbr.rel (0) target = $region5
    $region4: #{tpu_custom_call.1} parent=1 // pred_region
      _
    $region5: #{tpu_custom_call.1} parent=1 // pred_fallthru
      _
    // Predicated region
    $region6: #{tpu_custom_call.1} parent=1 // pred_check
      _
    $region7: #{tpu_custom_call.1} parent=1 // pred_check_branch
      %13 = sbr.rel (0) target = $region9
    $region8: #{tpu_custom_call.1} parent=1 // pred_region
      %s15 = ssub.s32 2048, 2048
      %16 = vsyncadd [#allocation3], %s15
      %s17 = sshll.u32 [#allocation2], 4
      %s18 = int_to_ptr.vmem [resolvable:$true] %s17
      %23 = dma.hbm_to_vmem [thread:$0]  %s1, 2048, %s18, [#allocation3], 512, 512, 32
    $region9: #{tpu_custom_call.1} parent=1 // pred_fallthru
      _
    // Predicated region
    $region10: #{tpu_custom_call.1} parent=1 // pred_check
      _
    $region11: #{tpu_custom_call.1} parent=1 // pred_check_branch
      %25 = sbr.rel (0) target = $region13
    $region12: #{tpu_custom_call.1} parent=1 // pred_region
      _
    $region13: #{tpu_custom_call.1} parent=1 // pred_fallthru
      _
    // Predicated region
    $region14: #{tpu_custom_call.1} parent=1 // pred_check
      _
    $region15: #{tpu_custom_call.1} parent=1 // pred_check_branch
      %27 = sbr.rel (0) target = $region17
    $region16: #{tpu_custom_call.1} parent=1 // pred_region
      %28 = dma.done [#allocation3], 2048
    $region17: #{tpu_custom_call.1} parent=1 // pred_fallthru
      _
    %v29 = vld [vmem:[%s0] sm:$0xff]
    %v30 = vld [vmem:[%s0 + $0x8] sm:$0xff]
    %v31 = vld [vmem:[%s0 + $0x10] sm:$0xff]
    %v32 = vld [vmem:[%s0 + $0x18] sm:$0xff]
    %v33 = vld [vmem:[%s0 + $0x20] sm:$0xff]
    %v34 = vld [vmem:[%s0 + $0x28] sm:$0xff]
    %v35 = vld [vmem:[%s0 + $0x30] sm:$0xff]
    %v36 = vld [vmem:[%s0 + $0x38] sm:$0xff]
    %v37 = vld [vmem:[#allocation2] sm:$0xff]
    %v38 = vld [vmem:[#allocation2 + $0x8] sm:$0xff]
    %v39 = vld [vmem:[#allocation2 + $0x10] sm:$0xff]
    %v40 = vld [vmem:[#allocation2 + $0x18] sm:$0xff]
    %v41 = vld [vmem:[#allocation2 + $0x20] sm:$0xff]
    %v42 = vld [vmem:[#allocation2 + $0x28] sm:$0xff]
    %v43 = vld [vmem:[#allocation2 + $0x30] sm:$0xff]
    %v44 = vld [vmem:[#allocation2 + $0x38] sm:$0xff]
    %v45 = vld [vmem:[#allocation2 + $0x40] sm:$0xff]
    %v46 = vld [vmem:[#allocation2 + $0x48] sm:$0xff]
    %v47 = vld [vmem:[#allocation2 + $0x50] sm:$0xff]
    %v48 = vld [vmem:[#allocation2 + $0x58] sm:$0xff]
    %v49 = vld [vmem:[#allocation2 + $0x60] sm:$0xff]
    %v50 = vld [vmem:[#allocation2 + $0x68] sm:$0xff]
    %v51 = vld [vmem:[#allocation2 + $0x70] sm:$0xff]
    %v52 = vld [vmem:[#allocation2 + $0x78] sm:$0xff]
    %v53 = vld [vmem:[%s2] sm:$0xf]
    %v55 = vlaneseq
    %v56 = vshrl.u32 %v55, 7
    %v57 = vsub.s32 0, %v56
    %v58 = vrot.slane %v53, %v57
    %v59 = vlaneseq
    %v60 = vshrl.u32 %v59, 7
    %v61 = vsub.s32 1, %v60
    %v62 = vrot.slane %v53, %v61
    %v63 = vlaneseq
    %v64 = vshrl.u32 %v63, 7
    %v65 = vsub.s32 2, %v64
    %v66 = vrot.slane %v53, %v65
    %v67 = vlaneseq
    %v68 = vshrl.u32 %v67, 7
    %v69 = vsub.s32 3, %v68
    %v70 = vrot.slane %v53, %v69
    %vm75 = vcmask 261120
    %v77 = vsel %vm75, %v29, 0
    %v80 = vsel %vm75, %v30, 0
    %v83 = vsel %vm75, %v31, 0
    %v86 = vsel %vm75, %v32, 0
    %v89 = vsel %vm75, %v33, 0
    %v92 = vsel %vm75, %v34, 0
    %v95 = vsel %vm75, %v35, 0
    %v98 = vsel %vm75, %v36, 0
    %100 = vmatprep.subr.mxu0 0.0
    %101 = vmatpush1.msra.mxu0 0.0
    %102 = vmatprep.subr.mxu0 0.0
    %103 = vmatpush1.msra.mxu0 0.0
    %104 = vmatprep.subr.mxu0 0.0
    %105 = vmatpush1.msra.mxu0 0.0
    %106 = vmatprep.subr.mxu0 0.0
    %107 = vmatpush1.msra.mxu0 0.0
    %108 = vmatprep.subr.mxu0 0.0
    %109 = vmatpush1.msra.mxu0 0.0
    %110 = vmatprep.subr.mxu0 0.0
    %111 = vmatpush1.msra.mxu0 0.0
    %112 = vmatprep.subr.mxu0 0.0
    %113 = vmatpush1.msra.mxu0 0.0
    %114 = vmatprep.subr.mxu0 0.0
    %115 = vmatpush1.msra.mxu0 0.0
    %116 = vmatprep.subr.mxu0 0.0
    %117 = vmatpush1.msra.mxu0 0.0
    %118 = vmatprep.subr.mxu0 0.0
    %119 = vmatpush1.msra.mxu0 0.0
    %120 = vmatprep.subr.mxu0 0.0
    %121 = vmatpush1.msra.mxu0 0.0
    %122 = vmatprep.subr.mxu0 0.0
    %123 = vmatpush1.msra.mxu0 0.0
    %124 = vmatprep.subr.mxu0 %v50
    %125 = vmatpush1.msra.mxu0 %v49
    %126 = vmatprep.subr.mxu0 %v46
    %127 = vmatpush1.msra.mxu0 %v45
    %128 = vmatprep.subr.mxu0 %v42
    %129 = vmatpush1.msra.mxu0 %v41
    %130 = vmatprep.subr.mxu0 %v38
    %131 = vmatpush1.msra.mxu0 %v37
    %132 = vmatprep.subr.mxu0 0.0
    %133 = vmatpush2.msra.mxu0 0.0
    %134 = vmatprep.subr.mxu0 0.0
    %135 = vmatpush2.msra.mxu0 0.0
    %136 = vmatprep.subr.mxu0 0.0
    %137 = vmatpush2.msra.mxu0 0.0
    %138 = vmatprep.subr.mxu0 0.0
    %139 = vmatpush2.msra.mxu0 0.0
    %140 = vmatprep.subr.mxu0 0.0
    %141 = vmatpush2.msra.mxu0 0.0
    %142 = vmatprep.subr.mxu0 0.0
    %143 = vmatpush2.msra.mxu0 0.0
    %144 = vmatprep.subr.mxu0 0.0
    %145 = vmatpush2.msra.mxu0 0.0
    %146 = vmatprep.subr.mxu0 0.0
    %147 = vmatpush2.msra.mxu0 0.0
    %148 = vmatprep.subr.mxu0 0.0
    %149 = vmatpush2.msra.mxu0 0.0
    %150 = vmatprep.subr.mxu0 0.0
    %151 = vmatpush2.msra.mxu0 0.0
    %152 = vmatprep.subr.mxu0 0.0
    %153 = vmatpush2.msra.mxu0 0.0
    %154 = vmatprep.subr.mxu0 0.0
    %155 = vmatpush2.msra.mxu0 0.0
    %156 = vmatprep.subr.mxu0 0.0
    %157 = vmatpush2.msra.mxu0 0.0
    %158 = vmatprep.subr.mxu0 0.0
    %159 = vmatpush2.msra.mxu0 0.0
    %160 = vmatprep.subr.mxu0 0.0
    %161 = vmatpush2.msra.mxu0 0.0
    %162 = vmatprep.subr.mxu0 0.0
    %163 = vmatpush2.msra.mxu0 0.0
    %164 = vmatprep.mubr.f32.mxu0 0.0
    %165 = vmatmul.mubr.f32.gmra.mxu0 %v77
    %v166 = vpop.f32.mrf.mxu0
    %v167 = vadd.f32 %v58, %v166
    %v168 = vpop.f32.mrf.mxu0
    %v169 = vadd.f32 %v62, %v168
    %170 = vmatprep.mubr.f32.mxu0 0.0
    %171 = vmatmul.mubr.f32.gmra.mxu0 %v80
    %v172 = vpop.f32.mrf.mxu0
    %v173 = vadd.f32 %v58, %v172
    %v174 = vpop.f32.mrf.mxu0
    %v175 = vadd.f32 %v62, %v174
    %176 = vmatprep.mubr.f32.mxu0 0.0
    %177 = vmatmul.mubr.f32.gmra.mxu0 %v83
    %v178 = vpop.f32.mrf.mxu0
    %v179 = vadd.f32 %v58, %v178
    %v180 = vpop.f32.mrf.mxu0
    %v181 = vadd.f32 %v62, %v180
    %182 = vmatprep.mubr.f32.mxu0 0.0
    %183 = vmatmul.mubr.f32.gmra.mxu0 %v86
    %v184 = vpop.f32.mrf.mxu0
    %v185 = vadd.f32 %v58, %v184
    %v186 = vpop.f32.mrf.mxu0
    %v187 = vadd.f32 %v62, %v186
    %188 = vmatprep.mubr.f32.mxu0 0.0
    %189 = vmatmul.mubr.f32.gmra.mxu0 %v89
    %v190 = vpop.f32.mrf.mxu0
    %v191 = vadd.f32 %v58, %v190
    %v192 = vpop.f32.mrf.mxu0
    %v193 = vadd.f32 %v62, %v192
    %194 = vmatprep.mubr.f32.mxu0 0.0
    %195 = vmatmul.mubr.f32.gmra.mxu0 %v92
    %v196 = vpop.f32.mrf.mxu0
    %v197 = vadd.f32 %v58, %v196
    %v198 = vpop.f32.mrf.mxu0
    %v199 = vadd.f32 %v62, %v198
    %200 = vmatprep.mubr.f32.mxu0 0.0
    %201 = vmatmul.mubr.f32.gmra.mxu0 %v95
    %v202 = vpop.f32.mrf.mxu0
    %v203 = vadd.f32 %v58, %v202
    %v204 = vpop.f32.mrf.mxu0
    %v205 = vadd.f32 %v62, %v204
    %206 = vmatprep.mubr.f32.mxu0 0.0
    %207 = vmatmul.mubr.f32.gmra.mxu0 %v98
    %v208 = vpop.f32.mrf.mxu0
    %v209 = vadd.f32 %v58, %v208
    %v210 = vpop.f32.mrf.mxu0
    %v211 = vadd.f32 %v62, %v210
    %212 = vdwg.mxu0
    %213 = vmatprep.subr.mxu0 0.0
    %214 = vmatpush1.msra.mxu0 0.0
    %215 = vmatprep.subr.mxu0 0.0
    %216 = vmatpush1.msra.mxu0 0.0
    %217 = vmatprep.subr.mxu0 0.0
    %218 = vmatpush1.msra.mxu0 0.0
    %219 = vmatprep.subr.mxu0 0.0
    %220 = vmatpush1.msra.mxu0 0.0
    %221 = vmatprep.subr.mxu0 0.0
    %222 = vmatpush1.msra.mxu0 0.0
    %223 = vmatprep.subr.mxu0 0.0
    %224 = vmatpush1.msra.mxu0 0.0
    %225 = vmatprep.subr.mxu0 0.0
    %226 = vmatpush1.msra.mxu0 0.0
    %227 = vmatprep.subr.mxu0 0.0
    %228 = vmatpush1.msra.mxu0 0.0
    %229 = vmatprep.subr.mxu0 0.0
    %230 = vmatpush1.msra.mxu0 0.0
    %231 = vmatprep.subr.mxu0 0.0
    %232 = vmatpush1.msra.mxu0 0.0
    %233 = vmatprep.subr.mxu0 0.0
    %234 = vmatpush1.msra.mxu0 0.0
    %235 = vmatprep.subr.mxu0 0.0
    %236 = vmatpush1.msra.mxu0 0.0
    %237 = vmatprep.subr.mxu0 %v52
    %238 = vmatpush1.msra.mxu0 %v51
    %239 = vmatprep.subr.mxu0 %v48
    %240 = vmatpush1.msra.mxu0 %v47
    %241 = vmatprep.subr.mxu0 %v44
    %242 = vmatpush1.msra.mxu0 %v43
    %243 = vmatprep.subr.mxu0 %v40
    %244 = vmatpush1.msra.mxu0 %v39
    %245 = vmatprep.subr.mxu0 0.0
    %246 = vmatpush2.msra.mxu0 0.0
    %247 = vmatprep.subr.mxu0 0.0
    %248 = vmatpush2.msra.mxu0 0.0
    %249 = vmatprep.subr.mxu0 0.0
    %250 = vmatpush2.msra.mxu0 0.0
    %251 = vmatprep.subr.mxu0 0.0
    %252 = vmatpush2.msra.mxu0 0.0
    %253 = vmatprep.subr.mxu0 0.0
    %254 = vmatpush2.msra.mxu0 0.0
    %255 = vmatprep.subr.mxu0 0.0
    %256 = vmatpush2.msra.mxu0 0.0
    %257 = vmatprep.subr.mxu0 0.0
    %258 = vmatpush2.msra.mxu0 0.0
    %259 = vmatprep.subr.mxu0 0.0
    %260 = vmatpush2.msra.mxu0 0.0
    %261 = vmatprep.subr.mxu0 0.0
    %262 = vmatpush2.msra.mxu0 0.0
    %263 = vmatprep.subr.mxu0 0.0
    %264 = vmatpush2.msra.mxu0 0.0
    %265 = vmatprep.subr.mxu0 0.0
    %266 = vmatpush2.msra.mxu0 0.0
    %267 = vmatprep.subr.mxu0 0.0
    %268 = vmatpush2.msra.mxu0 0.0
    %269 = vmatprep.subr.mxu0 0.0
    %270 = vmatpush2.msra.mxu0 0.0
    %271 = vmatprep.subr.mxu0 0.0
    %272 = vmatpush2.msra.mxu0 0.0
    %273 = vmatprep.subr.mxu0 0.0
    %274 = vmatpush2.msra.mxu0 0.0
    %275 = vmatprep.subr.mxu0 0.0
    %276 = vmatpush2.msra.mxu0 0.0
    %277 = vmatprep.mubr.f32.mxu0 0.0
    %278 = vmatmul.mubr.f32.gmra.mxu0 %v77
    %v279 = vpop.f32.mrf.mxu0
    %v280 = vadd.f32 %v66, %v279
    %v281 = vpop.f32.mrf.mxu0
    %v282 = vadd.f32 %v70, %v281
    %283 = vmatprep.mubr.f32.mxu0 0.0
    %284 = vmatmul.mubr.f32.gmra.mxu0 %v80
    %v285 = vpop.f32.mrf.mxu0
    %v286 = vadd.f32 %v66, %v285
    %v287 = vpop.f32.mrf.mxu0
    %v288 = vadd.f32 %v70, %v287
    %289 = vmatprep.mubr.f32.mxu0 0.0
    %290 = vmatmul.mubr.f32.gmra.mxu0 %v83
    %v291 = vpop.f32.mrf.mxu0
    %v292 = vadd.f32 %v66, %v291
    %v293 = vpop.f32.mrf.mxu0
    %v294 = vadd.f32 %v70, %v293
    %295 = vmatprep.mubr.f32.mxu0 0.0
    %296 = vmatmul.mubr.f32.gmra.mxu0 %v86
    %v297 = vpop.f32.mrf.mxu0
    %v298 = vadd.f32 %v66, %v297
    %v299 = vpop.f32.mrf.mxu0
    %v300 = vadd.f32 %v70, %v299
    %301 = vmatprep.mubr.f32.mxu0 0.0
    %302 = vmatmul.mubr.f32.gmra.mxu0 %v89
    %v303 = vpop.f32.mrf.mxu0
    %v304 = vadd.f32 %v66, %v303
    %v305 = vpop.f32.mrf.mxu0
    %v306 = vadd.f32 %v70, %v305
    %307 = vmatprep.mubr.f32.mxu0 0.0
    %308 = vmatmul.mubr.f32.gmra.mxu0 %v92
    %v309 = vpop.f32.mrf.mxu0
    %v310 = vadd.f32 %v66, %v309
    %v311 = vpop.f32.mrf.mxu0
    %v312 = vadd.f32 %v70, %v311
    %313 = vmatprep.mubr.f32.mxu0 0.0
    %314 = vmatmul.mubr.f32.gmra.mxu0 %v95
    %v315 = vpop.f32.mrf.mxu0
    %v316 = vadd.f32 %v66, %v315
    %v317 = vpop.f32.mrf.mxu0
    %v318 = vadd.f32 %v70, %v317
    %319 = vmatprep.mubr.f32.mxu0 0.0
    %320 = vmatmul.mubr.f32.gmra.mxu0 %v98
    %v321 = vpop.f32.mrf.mxu0
    %v322 = vadd.f32 %v66, %v321
    %v323 = vpop.f32.mrf.mxu0
    %v324 = vadd.f32 %v70, %v323
    %325 = vdwg.mxu0
    %326 = vst [vmem:[#allocation5] sm:$0xff] %v167
    %327 = vst [vmem:[#allocation5 + $0x8] sm:$0xff] %v169
    %328 = vst [vmem:[#allocation5 + $0x10] sm:$0xff] %v280
    %329 = vst [vmem:[#allocation5 + $0x18] sm:$0xff] %v282
    %330 = vst [vmem:[#allocation5 + $0x20] sm:$0xff] %v173
    %331 = vst [vmem:[#allocation5 + $0x28] sm:$0xff] %v175
    %332 = vst [vmem:[#allocation5 + $0x30] sm:$0xff] %v286
    %333 = vst [vmem:[#allocation5 + $0x38] sm:$0xff] %v288
    %334 = vst [vmem:[#allocation5 + $0x40] sm:$0xff] %v179
    %335 = vst [vmem:[#allocation5 + $0x48] sm:$0xff] %v181
    %336 = vst [vmem:[#allocation5 + $0x50] sm:$0xff] %v292
    %337 = vst [vmem:[#allocation5 + $0x58] sm:$0xff] %v294
    %338 = vst [vmem:[#allocation5 + $0x60] sm:$0xff] %v185
    %339 = vst [vmem:[#allocation5 + $0x68] sm:$0xff] %v187
    %340 = vst [vmem:[#allocation5 + $0x70] sm:$0xff] %v298
    %341 = vst [vmem:[#allocation5 + $0x78] sm:$0xff] %v300
    %342 = vst [vmem:[#allocation5 + $0x80] sm:$0xff] %v191
    %343 = vst [vmem:[#allocation5 + $0x88] sm:$0xff] %v193
    %344 = vst [vmem:[#allocation5 + $0x90] sm:$0xff] %v304
    %345 = vst [vmem:[#allocation5 + $0x98] sm:$0xff] %v306
    %346 = vst [vmem:[#allocation5 + $0xa0] sm:$0xff] %v197
    %347 = vst [vmem:[#allocation5 + $0xa8] sm:$0xff] %v199
    %348 = vst [vmem:[#allocation5 + $0xb0] sm:$0xff] %v310
    %349 = vst [vmem:[#allocation5 + $0xb8] sm:$0xff] %v312
    %350 = vst [vmem:[#allocation5 + $0xc0] sm:$0xff] %v203
    %351 = vst [vmem:[#allocation5 + $0xc8] sm:$0xff] %v205
    %352 = vst [vmem:[#allocation5 + $0xd0] sm:$0xff] %v316
    %353 = vst [vmem:[#allocation5 + $0xd8] sm:$0xff] %v318
    %354 = vst [vmem:[#allocation5 + $0xe0] sm:$0xff] %v209
    %355 = vst [vmem:[#allocation5 + $0xe8] sm:$0xff] %v211
    %356 = vst [vmem:[#allocation5 + $0xf0] sm:$0xff] %v322
    %357 = vst [vmem:[#allocation5 + $0xf8] sm:$0xff] %v324
    // Predicated region
    $region18: #{tpu_custom_call.1} parent=1 // pred_check
      _
    $region19: #{tpu_custom_call.1} parent=1 // pred_check_branch
      %359 = sbr.rel (0) target = $region21
    $region20: #{tpu_custom_call.1} parent=1 // pred_region
      %s361 = ssub.s32 4096, 4096
      %362 = vsyncadd [#allocation4], %s361
      %s363 = sshll.u32 [#allocation5], 4
      %s364 = int_to_ptr.vmem [resolvable:$true] %s363
      %369 = dma.vmem_to_hbm [thread:$0]  %s364, 4096, %s3, [#allocation4], 512, 512, 32
    $region21: #{tpu_custom_call.1} parent=1 // pred_fallthru
      _
    // Predicated region
    $region22: #{tpu_custom_call.1} parent=1 // pred_check
      _
    $region23: #{tpu_custom_call.1} parent=1 // pred_check_branch
      %371 = sbr.rel (0) target = $region25
    $region24: #{tpu_custom_call.1} parent=1 // pred_region
      %372 = dma.done [#allocation4], 4096
    $region25: #{tpu_custom_call.1} parent=1 // pred_fallthru
      _
    %373 = vsyncpa [#allocation3], 1
    %374 = vsyncpa [#allocation4], 1

</llo_original>
